<compile_context>
chip_gen: v7x
topology: tpu7x:2x2x1
jax: 0.10.0
libtpu: 0.0.40
codegen_flags: <defaults>
</compile_context>

<pallas_src>
import functools
from itertools import combinations

import numpy as np
import jax
import jax.numpy as jnp
from jax.experimental import pallas as pl
from jax.experimental.pallas import tpu as pltpu


def _round_up(x: int, m: int) -> int:
    return ((x + m - 1) // m) * m


def _all_triplets(labels: np.ndarray) -> np.ndarray:
    """Host-side AllTripletSelector: every (anchor, positive, negative) combo."""
    # TODO(synk): triplet selection is data-dependent host combinatorics (like the
    # PyTorch triplet_selector object); it stays in numpy glue, not in a kernel.
    triplets = []
    for label in np.unique(labels):
        label_mask = labels == label
        label_indices = np.where(label_mask)[0]
        if len(label_indices) < 2:
            continue
        negative_indices = np.where(~label_mask)[0]
        for a, p in combinations(label_indices, 2):
            for n in negative_indices:
                triplets.append((a, p, n))
    return np.asarray(triplets, dtype=np.int32).reshape(-1, 3)


def _vmem_budget_bytes() -> int:
    """~75% of physical per-core VMEM (leaves headroom for compiler scratch)."""
    try:
        cap = int(pltpu.get_tpu_info().vmem_capacity_bytes)
    except Exception:
        cap = 128 * 1024 * 1024  # v5e/v6e physical; conservative fallback
    return (cap * 3) // 4


# --------------------------------------------------------------------------------
# Kernel 1: raw Gram matrix blocks via the MXU.  No norm epilogue (folded into k2).
# --------------------------------------------------------------------------------
def _gram_kernel(tile_n, tile_c, e_ref, out_ref):
    i = pl.program_id(0)
    j = pl.program_id(1)
    r0 = pl.multiple_of(i * tile_n, tile_n)
    c0 = pl.multiple_of(j * tile_c, tile_c)
    rows = e_ref[pl.ds(r0, tile_n), :]                       # (tile_n, D_pad)
    cols = e_ref[pl.ds(c0, tile_c), :]                       # (tile_c, D_pad)
    # rows @ cols^T on the MXU, f32 accumulate.
    # TODO(synk): when tolerance allows, cast operands to bf16 (3x MXU on v6e/v7x)
    # and/or emit the Gram matrix in bf16 to halve the HBM store stream (kernel 1
    # is store-bound for small D on v5e/v6e); kept f32 to match PyTorch numerics.
    out_ref[...] = jax.lax.dot_general(
        rows, cols,
        dimension_numbers=(((1,), (1,)), ((), ())),
        preferred_element_type=jnp.float32)                  # (tile_n, tile_c)


def _pairwise_gram(e_pad, tile_n, tile_c, vmem_limit, single_buffer_resident):
    n_pad, d_pad = e_pad.shape
    if single_buffer_resident:
        # Constant-index_map blocks are double-buffered by default; single-buffer
        # the resident E to halve its VMEM footprint.
        e_spec = pl.BlockSpec((n_pad, d_pad), lambda i, j: (0, 0),
                              pipeline_mode=pl.Buffered(1))
    else:
        e_spec = pl.BlockSpec((n_pad, d_pad), lambda i, j: (0, 0))
    return pl.pallas_call(
        functools.partial(_gram_kernel, tile_n, tile_c),
        out_shape=jax.ShapeDtypeStruct((n_pad, n_pad), jnp.float32),
        grid_spec=pltpu.PrefetchScalarGridSpec(
            num_scalar_prefetch=0,
            grid=(n_pad // tile_n, n_pad // tile_c),
            in_specs=[e_spec],
            out_specs=pl.BlockSpec((tile_n, tile_c), lambda i, j: (i, j)),
        ),
        compiler_params=pltpu.CompilerParams(
            dimension_semantics=("parallel", "parallel"),    # shards on v7x's 2 TCs
            vmem_limit_bytes=vmem_limit),
    )(e_pad)


# --------------------------------------------------------------------------------
# Kernel 2: hinge over lane-dense blocks; per-block partial sums (parallel-safe).
#   d_ap - d_an = (||p||^2 - ||n||^2) - 2*(G[a,p] - G[a,n])   (||a||^2 cancels)
# --------------------------------------------------------------------------------
def _hinge_partial_kernel(margin, t_real, tile_r,
                          gap_ref, gan_ref, sqp_ref, sqn_ref,   # (tile_r, 128)
                          out_ref):                             # (1, 128) partial sum
    i = pl.program_id(0)
    hinge = jnp.maximum(
        sqp_ref[...] - sqn_ref[...]
        - 2.0 * (gap_ref[...] - gan_ref[...]) + margin, 0.0)
    # Mask padded triplet slots (flat id >= t_real); t_real is a static constant.
    row = jax.lax.broadcasted_iota(jnp.int32, hinge.shape, 0) + i * tile_r
    col = jax.lax.broadcasted_iota(jnp.int32, hinge.shape, 1)
    valid = (row * 128 + col) < t_real
    out_ref[...] = jnp.sum(jnp.where(valid, hinge, 0.0), axis=0, keepdims=True)


def online_triplet_loss(embeddings: jax.Array, triplets: jax.Array, margin: float):
    """Returns (losses.mean(), len(triplets)) like the PyTorch module."""
    n_triplets = int(triplets.shape[0])
    N, D = embeddings.shape
    if n_triplets == 0:
        # PyTorch's .mean() of an empty tensor is NaN; mirror that.
        return jnp.float32(jnp.nan), 0

    # --- Kernel 1: (N_pad, N_pad) Gram matrix ---------------------------------------
    tile_n = 256                                   # fills 256x256 MXU on v6e/v7x
    n_pad = _round_up(N, tile_n)                   # lane-dense, divisible by tile_n
    d_pad = _round_up(D, 128)
    e_pad = jnp.zeros((n_pad, d_pad), embeddings.dtype).at[:N, :D].set(embeddings)

    budget = _vmem_budget_bytes()
    e_bytes = n_pad * d_pad * e_pad.dtype.itemsize  # single-buffered resident copy
    # Column tile: full width when it fits, otherwise shrink so that
    # resident E + 2x double-buffered output slab stays inside the VMEM budget.
    tile_c = 256                                   # always divides n_pad
    for cand in (n_pad, 4096, 2048, 1024, 512):
        if cand <= n_pad and n_pad % cand == 0 and \
                e_bytes + 2 * tile_n * cand * 4 <= budget:
            tile_c = cand
            break
    # TODO(synk): if E alone exceeds the budget (huge N*D), switch to streamed
    # row/column slabs of E instead of a resident copy.
    required = e_bytes + 2 * tile_n * tile_c * 4
    vmem_limit = min(budget, max(2 * required, 32 * 1024 * 1024))

    try:
        gram = _pairwise_gram(e_pad, tile_n, tile_c, vmem_limit, True)
    except Exception:
        # Fallback if single-buffering via pl.Buffered(1) is unsupported.
        gram = _pairwise_gram(e_pad, tile_n, tile_c, vmem_limit, False)

    # --- XLA glue: gather 2*T Gram entries + 2*T squared norms (tiny traffic) -------
    # TODO(synk): biggest remaining win per review is fusing the masked hinge into
    # kernel 1 with label masks (removes this gather + kernel 2 entirely); kept the
    # gather path because it matches the module's generic triplet-index interface.
    a_idx = triplets[:, 0].astype(jnp.int32)
    p_idx = triplets[:, 1].astype(jnp.int32)
    n_idx = triplets[:, 2].astype(jnp.int32)
    # Note: a_idx * n_pad + p_idx is int32; fine for n_pad < ~46K (an N^2 f32
    # matrix is infeasible long before that).
    g_flat = gram.reshape(-1)
    g_ap = jnp.take(g_flat, a_idx * n_pad + p_idx)
    g_an = jnp.take(g_flat, a_idx * n_pad + n_idx)
    sq = jnp.sum(e_pad.astype(jnp.float32) ** 2, axis=1)        # (n_pad,)
    sq_p = jnp.take(sq, p_idx)
    sq_n = jnp.take(sq, n_idx)

    # --- Kernel 2: hinge + per-block partial sums over lane-dense blocks ------------
    rows = _round_up(-(-n_triplets // 128), 8)     # sublane-aligned row count
    tile_r = min(1024, rows)                       # >=2 MiB of inputs per grid step
    rows = _round_up(rows, tile_r)
    pad = rows * 128 - n_triplets

    def _tile(v):
        return jnp.pad(v, (0, pad)).reshape(rows, 128)

    num_blocks = rows // tile_r
    partials = pl.pallas_call(
        functools.partial(_hinge_partial_kernel, float(margin), n_triplets, tile_r),
        out_shape=jax.ShapeDtypeStruct((num_blocks, 128), jnp.float32),
        grid_spec=pltpu.PrefetchScalarGridSpec(
            num_scalar_prefetch=0,
            grid=(num_blocks,),
            in_specs=[pl.BlockSpec((tile_r, 128), lambda i: (i, 0))] * 4,
            out_specs=pl.BlockSpec((1, 128), lambda i: (i, 0)),
        ),
        compiler_params=pltpu.CompilerParams(
            dimension_semantics=("parallel",)),    # partial sums -> no serial acc
    )(_tile(g_ap), _tile(g_an), _tile(sq_p), _tile(sq_n))

    loss = jnp.sum(partials) / jnp.float32(n_triplets)
    return loss, n_triplets


if __name__ == "__main__":
    key = jax.random.PRNGKey(0)

    # Small synthetic problem: 8 embeddings of dim 32, two classes.
    N, D = 8, 32
    embeddings = jax.random.normal(key, (N, D), dtype=jnp.float32)
    labels = np.array([0, 0, 1, 1, 0, 1, 0, 1], dtype=np.int32)
    margin = 1.0

    triplets_np = _all_triplets(labels)
    triplets = jnp.asarray(triplets_np)

    loss, n_trip = online_triplet_loss(embeddings, triplets, margin)
    loss = jax.block_until_ready(loss)

    # Pure-numpy reference of the PyTorch forward.
    e = np.asarray(embeddings)
    a = e[triplets_np[:, 0]]
    p = e[triplets_np[:, 1]]
    n = e[triplets_np[:, 2]]
    ap = ((a - p) ** 2).sum(1)
    an = ((a - n) ** 2).sum(1)
    ref = np.maximum(ap - an + margin, 0.0).mean()

    assert n_trip == len(triplets_np)
    assert np.allclose(float(loss), ref, rtol=1e-4, atol=1e-4), (float(loss), ref)
    print("KERNEL_OK")
</pallas_src>

<mosaic_0001>
module attributes {stable_mosaic.version = 11 : i64} {
  func.func @_gram_kernel(%arg0: i32, %arg1: i32, %arg2: memref<256x128xf32, #tpu.memory_space<vmem>>, %arg3: memref<256x256xf32, #tpu.memory_space<vmem>>) attributes {dimension_semantics = [#tpu.dimension_semantics<parallel>, #tpu.dimension_semantics<parallel>], iteration_bounds = array<i64: 1, 1>, scalar_prefetch = 0 : i64, scratch_operands = 0 : i64, tpu.core_type = #tpu.core_type<tc>, window_params = [{pipeline_mode = #tpu.pipeline_mode<synchronous>, transform_indices = @transform_0, window_bounds = array<i64: 256, 128>}, {transform_indices = @transform_1, window_bounds = array<i64: 256, 256>}]} {
    %c256_i32 = arith.constant 256 : i32
    %0 = arith.muli %arg0, %c256_i32 : i32
    %1 = tpu.assume_multiple %0, 256 : i32
    %c256_i32_0 = arith.constant 256 : i32
    %2 = arith.muli %arg1, %c256_i32_0 : i32
    %3 = tpu.assume_multiple %2, 256 : i32
    %4 = arith.index_cast %1 : i32 to index
    %c0 = arith.constant 0 : index
    %5 = vector.load %arg2[%4, %c0] : memref<256x128xf32, #tpu.memory_space<vmem>>, vector<256x128xf32>
    %6 = arith.index_cast %3 : i32 to index
    %c0_1 = arith.constant 0 : index
    %7 = vector.load %arg2[%6, %c0_1] : memref<256x128xf32, #tpu.memory_space<vmem>>, vector<256x128xf32>
    %cst = arith.constant dense<0.000000e+00> : vector<256x256xf32>
    %8 = tpu.matmul %5, %7, %cst {dimension_numbers = #tpu.dot_dimension_numbers<[1], [1], [0], [0], [0, 0, 1, 0], [], []>} : vector<256x128xf32>, vector<256x128xf32>, vector<256x256xf32> -> vector<256x256xf32>
    %c0_2 = arith.constant 0 : index
    %c0_3 = arith.constant 0 : index
    %9 = vector.load %arg3[%c0_2, %c0_3] : memref<256x256xf32, #tpu.memory_space<vmem>>, vector<256x256xf32>
    tpu.vector_store %arg3[%c0_2, %c0_3], %8 {strides = array<i32>} : memref<256x256xf32, #tpu.memory_space<vmem>>, vector<256x256xf32>,
    return
  }
  func.func @transform_0(%arg0: i32, %arg1: i32) -> (i32, i32) {
    %c0_i32 = arith.constant 0 : i32
    %c0_i32_0 = arith.constant 0 : i32
    %c0_i32_1 = arith.constant 0 : i32
    return %c0_i32, %c0_i32_0 : i32, i32
  }
  func.func @transform_1(%arg0: i32, %arg1: i32) -> (i32, i32) {
    %c0_i32 = arith.constant 0 : i32
    return %arg0, %arg1 : i32, i32
  }
}

module attributes {stable_mosaic.version = 11 : i64} {
  func.func @_gram_kernel(%arg0: i32, %arg1: i32, %arg2: memref<256x128xf32, #tpu.memory_space<vmem>>, %arg3: memref<256x256xf32, #tpu.memory_space<vmem>>) attributes {dimension_semantics = [#tpu.dimension_semantics<parallel>, #tpu.dimension_semantics<parallel>], iteration_bounds = array<i64: 1, 1>, scalar_prefetch = 0 : i64, scratch_operands = 0 : i64, tpu.core_type = #tpu.core_type<tc>, window_params = [{pipeline_mode = #tpu.pipeline_mode<synchronous>, transform_indices = @transform_0, window_bounds = array<i64: 256, 128>}, {transform_indices = @transform_1, window_bounds = array<i64: 256, 256>}]} {
    %c256_i32 = arith.constant 256 : i32
    %0 = arith.muli %arg0, %c256_i32 : i32
    %1 = tpu.assume_multiple %0, 256 : i32
    %c256_i32_0 = arith.constant 256 : i32
    %2 = arith.muli %arg1, %c256_i32_0 : i32
    %3 = tpu.assume_multiple %2, 256 : i32
    %4 = arith.index_cast %1 : i32 to index
    %c0 = arith.constant 0 : index
    %5 = vector.load %arg2[%4, %c0] : memref<256x128xf32, #tpu.memory_space<vmem>>, vector<256x128xf32>
    %6 = arith.index_cast %3 : i32 to index
    %c0_1 = arith.constant 0 : index
    %7 = vector.load %arg2[%6, %c0_1] : memref<256x128xf32, #tpu.memory_space<vmem>>, vector<256x128xf32>
    %cst = arith.constant dense<0.000000e+00> : vector<256x256xf32>
    %8 = tpu.matmul %5, %7, %cst {dimension_numbers = #tpu.dot_dimension_numbers<[1], [1], [0], [0], [0, 0, 1, 0], [], []>} : vector<256x128xf32>, vector<256x128xf32>, vector<256x256xf32> -> vector<256x256xf32>
    %c0_2 = arith.constant 0 : index
    %c0_3 = arith.constant 0 : index
    %9 = vector.load %arg3[%c0_2, %c0_3] : memref<256x256xf32, #tpu.memory_space<vmem>>, vector<256x256xf32>
    tpu.vector_store %arg3[%c0_2, %c0_3], %8 {strides = array<i32>} : memref<256x256xf32, #tpu.memory_space<vmem>>, vector<256x256xf32>,
    return
  }
  func.func @transform_0(%arg0: i32, %arg1: i32) -> (i32, i32) {
    %c0_i32 = arith.constant 0 : i32
    %c0_i32_0 = arith.constant 0 : i32
    %c0_i32_1 = arith.constant 0 : i32
    return %c0_i32, %c0_i32_0 : i32, i32
  }
  func.func @transform_1(%arg0: i32, %arg1: i32) -> (i32, i32) {
    %c0_i32 = arith.constant 0 : i32
    return %arg0, %arg1 : i32, i32
  }
}

</mosaic_0001>

<llo_original>
// kernel: tpu_custom_call.1
$region0: #{tpu_custom_call.1}
  #allocation0 [shape = 'u32[]', space=smem, size = 0x4, offset = 0x4, fixed_abs, tag = 'smem constant byte address 0x4 - core index']
  #allocation1 [shape = 'u32[144,128]{1,0:T(1,128)}', space=vmem, size = 0x12000, scoped, tag = 'internal scratch']
  %s0 = inlined_call_operand.hbm [shape: f32[256,128], index: 0, kind: input, shape index: {}]
  %s1 = inlined_call_operand.hbm [shape: f32[256,256], index: 1, kind: output, shape index: {}]
  %s2 = sld [smem:[#allocation0]]
  $region18: #{tpu_custom_call.1} parent=0
    _
  %s4 = ssub.s32 1, %s2
  %s5 = scalar_select 0, %s4, %s2
  $region1: #{tpu_custom_call.1} parent=0
    #allocation2 [shape = 'u8[131072]{0}', space=vmem, size = 0x20000, scoped, tag = 'input window, operand 0, single buffered']
    #allocation3 [shape = 's32[1]{0}', space=sflag, size = 0x4, scoped, tag = 'scoped memory for tpu_custom_call.1']
    #allocation4 [shape = 's32[1]{0}', space=sflag, size = 0x4, scoped, tag = 'scoped memory for tpu_custom_call.1']
    #allocation5 [shape = 'u8[262144]{0}', space=vmem, size = 0x40000, scoped, tag = 'output window, operand 0, single buffered']
    %6 = vsyncpa [#allocation3], 0
    %7 = vsyncpa [#allocation4], 0
    // Predicated region
    $region2: #{tpu_custom_call.1} parent=1 // pred_check
      _
    $region3: #{tpu_custom_call.1} parent=1 // pred_check_branch
      %9 = sbr.rel (0) target = $region5
    $region4: #{tpu_custom_call.1} parent=1 // pred_region
      %s11 = ssub.s32 4096, 4096
      %12 = vsyncadd [#allocation3], %s11
      %s13 = sshll.u32 [#allocation2], 4
      %s14 = int_to_ptr.vmem [resolvable:$true] %s13
      %19 = dma.hbm_to_vmem [thread:$0]  %s0, 4096, %s14, [#allocation3], 128, 128, 8
    $region5: #{tpu_custom_call.1} parent=1 // pred_fallthru
      _
    // Predicated region
    $region6: #{tpu_custom_call.1} parent=1 // pred_check
      _
    $region7: #{tpu_custom_call.1} parent=1 // pred_check_branch
      %21 = sbr.rel (0) target = $region9
    $region8: #{tpu_custom_call.1} parent=1 // pred_region
      %22 = dma.done [#allocation3], 4096
    $region9: #{tpu_custom_call.1} parent=1 // pred_fallthru
      _
    %s23 = smul.u32 0, 256
    %s24 = smul.u32 0, 256
    %s25 = scalar_lea.vmem [#allocation2], %s23
    %v26 = vld [vmem:[%s25] sm:$0xff]
    %v27 = vld [vmem:[%s25 + $0x8] sm:$0xff]
    %v28 = vld [vmem:[%s25 + $0x10] sm:$0xff]
    %v29 = vld [vmem:[%s25 + $0x18] sm:$0xff]
    %v30 = vld [vmem:[%s25 + $0x20] sm:$0xff]
    %v31 = vld [vmem:[%s25 + $0x28] sm:$0xff]
    %v32 = vld [vmem:[%s25 + $0x30] sm:$0xff]
    %v33 = vld [vmem:[%s25 + $0x38] sm:$0xff]
    %v34 = vld [vmem:[%s25 + $0x40] sm:$0xff]
    %v35 = vld [vmem:[%s25 + $0x48] sm:$0xff]
    %v36 = vld [vmem:[%s25 + $0x50] sm:$0xff]
    %v37 = vld [vmem:[%s25 + $0x58] sm:$0xff]
    %v38 = vld [vmem:[%s25 + $0x60] sm:$0xff]
    %v39 = vld [vmem:[%s25 + $0x68] sm:$0xff]
    %v40 = vld [vmem:[%s25 + $0x70] sm:$0xff]
    %v41 = vld [vmem:[%s25 + $0x78] sm:$0xff]
    %v42 = vld [vmem:[%s25 + $0x80] sm:$0xff]
    %v43 = vld [vmem:[%s25 + $0x88] sm:$0xff]
    %v44 = vld [vmem:[%s25 + $0x90] sm:$0xff]
    %v45 = vld [vmem:[%s25 + $0x98] sm:$0xff]
    %v46 = vld [vmem:[%s25 + $0xa0] sm:$0xff]
    %v47 = vld [vmem:[%s25 + $0xa8] sm:$0xff]
    %v48 = vld [vmem:[%s25 + $0xb0] sm:$0xff]
    %v49 = vld [vmem:[%s25 + $0xb8] sm:$0xff]
    %v50 = vld [vmem:[%s25 + $0xc0] sm:$0xff]
    %v51 = vld [vmem:[%s25 + $0xc8] sm:$0xff]
    %v52 = vld [vmem:[%s25 + $0xd0] sm:$0xff]
    %v53 = vld [vmem:[%s25 + $0xd8] sm:$0xff]
    %v54 = vld [vmem:[%s25 + $0xe0] sm:$0xff]
    %v55 = vld [vmem:[%s25 + $0xe8] sm:$0xff]
    %v56 = vld [vmem:[%s25 + $0xf0] sm:$0xff]
    %v57 = vld [vmem:[%s25 + $0xf8] sm:$0xff]
    %s58 = scalar_lea.vmem [#allocation2], %s24
    %v59 = vld [vmem:[%s58] sm:$0xff]
    %v60 = vld [vmem:[%s58 + $0x8] sm:$0xff]
    %v61 = vld [vmem:[%s58 + $0x10] sm:$0xff]
    %v62 = vld [vmem:[%s58 + $0x18] sm:$0xff]
    %v63 = vld [vmem:[%s58 + $0x20] sm:$0xff]
    %v64 = vld [vmem:[%s58 + $0x28] sm:$0xff]
    %v65 = vld [vmem:[%s58 + $0x30] sm:$0xff]
    %v66 = vld [vmem:[%s58 + $0x38] sm:$0xff]
    %v67 = vld [vmem:[%s58 + $0x40] sm:$0xff]
    %v68 = vld [vmem:[%s58 + $0x48] sm:$0xff]
    %v69 = vld [vmem:[%s58 + $0x50] sm:$0xff]
    %v70 = vld [vmem:[%s58 + $0x58] sm:$0xff]
    %v71 = vld [vmem:[%s58 + $0x60] sm:$0xff]
    %v72 = vld [vmem:[%s58 + $0x68] sm:$0xff]
    %v73 = vld [vmem:[%s58 + $0x70] sm:$0xff]
    %v74 = vld [vmem:[%s58 + $0x78] sm:$0xff]
    %v75 = vld [vmem:[%s58 + $0x80] sm:$0xff]
    %v76 = vld [vmem:[%s58 + $0x88] sm:$0xff]
    %v77 = vld [vmem:[%s58 + $0x90] sm:$0xff]
    %v78 = vld [vmem:[%s58 + $0x98] sm:$0xff]
    %v79 = vld [vmem:[%s58 + $0xa0] sm:$0xff]
    %v80 = vld [vmem:[%s58 + $0xa8] sm:$0xff]
    %v81 = vld [vmem:[%s58 + $0xb0] sm:$0xff]
    %v82 = vld [vmem:[%s58 + $0xb8] sm:$0xff]
    %v83 = vld [vmem:[%s58 + $0xc0] sm:$0xff]
    %v84 = vld [vmem:[%s58 + $0xc8] sm:$0xff]
    %v85 = vld [vmem:[%s58 + $0xd0] sm:$0xff]
    %v86 = vld [vmem:[%s58 + $0xd8] sm:$0xff]
    %v87 = vld [vmem:[%s58 + $0xe0] sm:$0xff]
    %v88 = vld [vmem:[%s58 + $0xe8] sm:$0xff]
    %v89 = vld [vmem:[%s58 + $0xf0] sm:$0xff]
    %v90 = vld [vmem:[%s58 + $0xf8] sm:$0xff]
    %91 = vmatprep.subr.mxu0 0.0
    %92 = vmatpush1.xpose.msra.mxu0 %v59
    %93 = vmatprep.subr.mxu0 0.0
    %94 = vmatpush1.xpose.msra.mxu0 %v60
    %95 = vmatprep.subr.mxu0 0.0
    %96 = vmatpush1.xpose.msra.mxu0 %v61
    %97 = vmatprep.subr.mxu0 0.0
    %98 = vmatpush1.xpose.msra.mxu0 %v62
    %99 = vmatprep.subr.mxu0 0.0
    %100 = vmatpush1.xpose.msra.mxu0 %v63
    %101 = vmatprep.subr.mxu0 0.0
    %102 = vmatpush1.xpose.msra.mxu0 %v64
    %103 = vmatprep.subr.mxu0 0.0
    %104 = vmatpush1.xpose.msra.mxu0 %v65
    %105 = vmatprep.subr.mxu0 0.0
    %106 = vmatpush1.xpose.msra.mxu0 %v66
    %107 = vmatprep.subr.mxu0 0.0
    %108 = vmatpush1.xpose.msra.mxu0 %v67
    %109 = vmatprep.subr.mxu0 0.0
    %110 = vmatpush1.xpose.msra.mxu0 %v68
    %111 = vmatprep.subr.mxu0 0.0
    %112 = vmatpush1.xpose.msra.mxu0 %v69
    %113 = vmatprep.subr.mxu0 0.0
    %114 = vmatpush1.xpose.msra.mxu0 %v70
    %115 = vmatprep.subr.mxu0 0.0
    %116 = vmatpush1.xpose.msra.mxu0 %v71
    %117 = vmatprep.subr.mxu0 0.0
    %118 = vmatpush1.xpose.msra.mxu0 %v72
    %119 = vmatprep.subr.mxu0 0.0
    %120 = vmatpush1.xpose.msra.mxu0 %v73
    %121 = vmatprep.subr.mxu0 0.0
    %122 = vmatpush1.xpose.msra.mxu0 %v74
    %123 = vmatprep.subr.mxu0 0.0
    %124 = vmatpush1.xpose.msra.mxu0 %v75
    %125 = vmatprep.subr.mxu0 0.0
    %126 = vmatpush1.xpose.msra.mxu0 %v76
    %127 = vmatprep.subr.mxu0 0.0
    %128 = vmatpush1.xpose.msra.mxu0 %v77
    %129 = vmatprep.subr.mxu0 0.0
    %130 = vmatpush1.xpose.msra.mxu0 %v78
    %131 = vmatprep.subr.mxu0 0.0
    %132 = vmatpush1.xpose.msra.mxu0 %v79
    %133 = vmatprep.subr.mxu0 0.0
    %134 = vmatpush1.xpose.msra.mxu0 %v80
    %135 = vmatprep.subr.mxu0 0.0
    %136 = vmatpush1.xpose.msra.mxu0 %v81
    %137 = vmatprep.subr.mxu0 0.0
    %138 = vmatpush1.xpose.msra.mxu0 %v82
    %139 = vmatprep.subr.mxu0 0.0
    %140 = vmatpush1.xpose.msra.mxu0 %v83
    %141 = vmatprep.subr.mxu0 0.0
    %142 = vmatpush1.xpose.msra.mxu0 %v84
    %143 = vmatprep.subr.mxu0 0.0
    %144 = vmatpush1.xpose.msra.mxu0 %v85
    %145 = vmatprep.subr.mxu0 0.0
    %146 = vmatpush1.xpose.msra.mxu0 %v86
    %147 = vmatprep.subr.mxu0 0.0
    %148 = vmatpush1.xpose.msra.mxu0 %v87
    %149 = vmatprep.subr.mxu0 0.0
    %150 = vmatpush1.xpose.msra.mxu0 %v88
    %151 = vmatprep.subr.mxu0 0.0
    %152 = vmatpush1.xpose.msra.mxu0 %v89
    %153 = vmatprep.subr.mxu0 0.0
    %154 = vmatpush1.xpose.msra.mxu0 %v90
    %155 = vmatprep.mubr.f32.mxu0 0.0
    %156 = vmatmul.mubr.f32.gmra.mrb[0].mxu0 %v26
    %v157 = vpop.f32.mrb[0].mxu0
    %v158 = vadd.f32 0.0, %v157
    %v159 = vpop.f32.mrb[0].mxu0
    %v160 = vadd.f32 0.0, %v159
    %161 = vmatprep.mubr.f32.mxu0 0.0
    %162 = vmatmul.mubr.f32.gmra.mrb[0].mxu0 %v27
    %v163 = vpop.f32.mrb[0].mxu0
    %v164 = vadd.f32 0.0, %v163
    %v165 = vpop.f32.mrb[0].mxu0
    %v166 = vadd.f32 0.0, %v165
    %167 = vmatprep.mubr.f32.mxu0 0.0
    %168 = vmatmul.mubr.f32.gmra.mrb[0].mxu0 %v28
    %v169 = vpop.f32.mrb[0].mxu0
    %v170 = vadd.f32 0.0, %v169
    %v171 = vpop.f32.mrb[0].mxu0
    %v172 = vadd.f32 0.0, %v171
    %173 = vmatprep.mubr.f32.mxu0 0.0
    %174 = vmatmul.mubr.f32.gmra.mrb[0].mxu0 %v29
    %v175 = vpop.f32.mrb[0].mxu0
    %v176 = vadd.f32 0.0, %v175
    %v177 = vpop.f32.mrb[0].mxu0
    %v178 = vadd.f32 0.0, %v177
    %179 = vmatprep.mubr.f32.mxu0 0.0
    %180 = vmatmul.mubr.f32.gmra.mrb[0].mxu0 %v30
    %v181 = vpop.f32.mrb[0].mxu0
    %v182 = vadd.f32 0.0, %v181
    %v183 = vpop.f32.mrb[0].mxu0
    %v184 = vadd.f32 0.0, %v183
    %185 = vmatprep.mubr.f32.mxu0 0.0
    %186 = vmatmul.mubr.f32.gmra.mrb[0].mxu0 %v31
    %v187 = vpop.f32.mrb[0].mxu0
    %v188 = vadd.f32 0.0, %v187
    %v189 = vpop.f32.mrb[0].mxu0
    %v190 = vadd.f32 0.0, %v189
    %191 = vmatprep.mubr.f32.mxu0 0.0
    %192 = vmatmul.mubr.f32.gmra.mrb[0].mxu0 %v32
    %v193 = vpop.f32.mrb[0].mxu0
    %v194 = vadd.f32 0.0, %v193
    %v195 = vpop.f32.mrb[0].mxu0
    %v196 = vadd.f32 0.0, %v195
    %197 = vmatprep.mubr.f32.mxu0 0.0
    %198 = vmatmul.mubr.f32.gmra.mrb[0].mxu0 %v33
    %v199 = vpop.f32.mrb[0].mxu0
    %v200 = vadd.f32 0.0, %v199
    %v201 = vpop.f32.mrb[0].mxu0
    %v202 = vadd.f32 0.0, %v201
    %203 = vmatprep.mubr.f32.mxu0 0.0
    %204 = vmatmul.mubr.f32.gmra.mrb[0].mxu0 %v34
    %v205 = vpop.f32.mrb[0].mxu0
    %v206 = vadd.f32 0.0, %v205
    %v207 = vpop.f32.mrb[0].mxu0
    %v208 = vadd.f32 0.0, %v207
    %209 = vmatprep.mubr.f32.mxu0 0.0
    %210 = vmatmul.mubr.f32.gmra.mrb[0].mxu0 %v35
    %v211 = vpop.f32.mrb[0].mxu0
    %v212 = vadd.f32 0.0, %v211
    %v213 = vpop.f32.mrb[0].mxu0
    %v214 = vadd.f32 0.0, %v213
    %215 = vmatprep.mubr.f32.mxu0 0.0
    %216 = vmatmul.mubr.f32.gmra.mrb[0].mxu0 %v36
    %v217 = vpop.f32.mrb[0].mxu0
    %v218 = vadd.f32 0.0, %v217
    %v219 = vpop.f32.mrb[0].mxu0
    %v220 = vadd.f32 0.0, %v219
    %221 = vmatprep.mubr.f32.mxu0 0.0
    %222 = vmatmul.mubr.f32.gmra.mrb[0].mxu0 %v37
    %v223 = vpop.f32.mrb[0].mxu0
    %v224 = vadd.f32 0.0, %v223
    %v225 = vpop.f32.mrb[0].mxu0
    %v226 = vadd.f32 0.0, %v225
    %227 = vmatprep.mubr.f32.mxu0 0.0
    %228 = vmatmul.mubr.f32.gmra.mrb[0].mxu0 %v38
    %v229 = vpop.f32.mrb[0].mxu0
    %v230 = vadd.f32 0.0, %v229
    %v231 = vpop.f32.mrb[0].mxu0
    %v232 = vadd.f32 0.0, %v231
    %233 = vmatprep.mubr.f32.mxu0 0.0
    %234 = vmatmul.mubr.f32.gmra.mrb[0].mxu0 %v39
    %v235 = vpop.f32.mrb[0].mxu0
    %v236 = vadd.f32 0.0, %v235
    %v237 = vpop.f32.mrb[0].mxu0
    %v238 = vadd.f32 0.0, %v237
    %239 = vmatprep.mubr.f32.mxu0 0.0
    %240 = vmatmul.mubr.f32.gmra.mrb[0].mxu0 %v40
    %v241 = vpop.f32.mrb[0].mxu0
    %v242 = vadd.f32 0.0, %v241
    %v243 = vpop.f32.mrb[0].mxu0
    %v244 = vadd.f32 0.0, %v243
    %245 = vmatprep.mubr.f32.mxu0 0.0
    %246 = vmatmul.mubr.f32.gmra.mrb[0].mxu0 %v41
    %v247 = vpop.f32.mrb[0].mxu0
    %v248 = vadd.f32 0.0, %v247
    %v249 = vpop.f32.mrb[0].mxu0
    %v250 = vadd.f32 0.0, %v249
    %251 = vmatprep.mubr.f32.mxu0 0.0
    %252 = vmatmul.mubr.f32.gmra.mrb[0].mxu0 %v42
    %v253 = vpop.f32.mrb[0].mxu0
    %v254 = vadd.f32 0.0, %v253
    %v255 = vpop.f32.mrb[0].mxu0
    %v256 = vadd.f32 0.0, %v255
    %257 = vmatprep.mubr.f32.mxu0 0.0
    %258 = vmatmul.mubr.f32.gmra.mrb[0].mxu0 %v43
    %v259 = vpop.f32.mrb[0].mxu0
    %v260 = vadd.f32 0.0, %v259
    %v261 = vpop.f32.mrb[0].mxu0
    %v262 = vadd.f32 0.0, %v261
    %263 = vmatprep.mubr.f32.mxu0 0.0
    %264 = vmatmul.mubr.f32.gmra.mrb[0].mxu0 %v44
    %v265 = vpop.f32.mrb[0].mxu0
    %v266 = vadd.f32 0.0, %v265
    %v267 = vpop.f32.mrb[0].mxu0
    %v268 = vadd.f32 0.0, %v267
    %269 = vmatprep.mubr.f32.mxu0 0.0
    %270 = vmatmul.mubr.f32.gmra.mrb[0].mxu0 %v45
    %v271 = vpop.f32.mrb[0].mxu0
    %v272 = vadd.f32 0.0, %v271
    %v273 = vpop.f32.mrb[0].mxu0
    %v274 = vadd.f32 0.0, %v273
    %275 = vmatprep.mubr.f32.mxu0 0.0
    %276 = vmatmul.mubr.f32.gmra.mrb[0].mxu0 %v46
    %v277 = vpop.f32.mrb[0].mxu0
    %v278 = vadd.f32 0.0, %v277
    %v279 = vpop.f32.mrb[0].mxu0
    %v280 = vadd.f32 0.0, %v279
    %281 = vmatprep.mubr.f32.mxu0 0.0
    %282 = vmatmul.mubr.f32.gmra.mrb[0].mxu0 %v47
    %v283 = vpop.f32.mrb[0].mxu0
    %v284 = vadd.f32 0.0, %v283
    %v285 = vpop.f32.mrb[0].mxu0
    %v286 = vadd.f32 0.0, %v285
    %287 = vmatprep.mubr.f32.mxu0 0.0
    %288 = vmatmul.mubr.f32.gmra.mrb[0].mxu0 %v48
    %v289 = vpop.f32.mrb[0].mxu0
    %v290 = vadd.f32 0.0, %v289
    %v291 = vpop.f32.mrb[0].mxu0
    %v292 = vadd.f32 0.0, %v291
    %293 = vmatprep.mubr.f32.mxu0 0.0
    %294 = vmatmul.mubr.f32.gmra.mrb[0].mxu0 %v49
    %v295 = vpop.f32.mrb[0].mxu0
    %v296 = vadd.f32 0.0, %v295
    %v297 = vpop.f32.mrb[0].mxu0
    %v298 = vadd.f32 0.0, %v297
    %299 = vmatprep.mubr.f32.mxu0 0.0
    %300 = vmatmul.mubr.f32.gmra.mrb[0].mxu0 %v50
    %v301 = vpop.f32.mrb[0].mxu0
    %v302 = vadd.f32 0.0, %v301
    %v303 = vpop.f32.mrb[0].mxu0
    %v304 = vadd.f32 0.0, %v303
    %305 = vmatprep.mubr.f32.mxu0 0.0
    %306 = vmatmul.mubr.f32.gmra.mrb[0].mxu0 %v51
    %v307 = vpop.f32.mrb[0].mxu0
    %v308 = vadd.f32 0.0, %v307
    %v309 = vpop.f32.mrb[0].mxu0
    %v310 = vadd.f32 0.0, %v309
    %311 = vmatprep.mubr.f32.mxu0 0.0
    %312 = vmatmul.mubr.f32.gmra.mrb[0].mxu0 %v52
    %v313 = vpop.f32.mrb[0].mxu0
    %v314 = vadd.f32 0.0, %v313
    %v315 = vpop.f32.mrb[0].mxu0
    %v316 = vadd.f32 0.0, %v315
    %317 = vmatprep.mubr.f32.mxu0 0.0
    %318 = vmatmul.mubr.f32.gmra.mrb[0].mxu0 %v53
    %v319 = vpop.f32.mrb[0].mxu0
    %v320 = vadd.f32 0.0, %v319
    %v321 = vpop.f32.mrb[0].mxu0
    %v322 = vadd.f32 0.0, %v321
    %323 = vmatprep.mubr.f32.mxu0 0.0
    %324 = vmatmul.mubr.f32.gmra.mrb[0].mxu0 %v54
    %v325 = vpop.f32.mrb[0].mxu0
    %v326 = vadd.f32 0.0, %v325
    %v327 = vpop.f32.mrb[0].mxu0
    %v328 = vadd.f32 0.0, %v327
    %329 = vmatprep.mubr.f32.mxu0 0.0
    %330 = vmatmul.mubr.f32.gmra.mrb[0].mxu0 %v55
    %v331 = vpop.f32.mrb[0].mxu0
    %v332 = vadd.f32 0.0, %v331
    %v333 = vpop.f32.mrb[0].mxu0
    %v334 = vadd.f32 0.0, %v333
    %335 = vmatprep.mubr.f32.mxu0 0.0
    %336 = vmatmul.mubr.f32.gmra.mrb[0].mxu0 %v56
    %v337 = vpop.f32.mrb[0].mxu0
    %v338 = vadd.f32 0.0, %v337
    %v339 = vpop.f32.mrb[0].mxu0
    %v340 = vadd.f32 0.0, %v339
    %341 = vmatprep.mubr.f32.mxu0 0.0
    %342 = vmatmul.mubr.f32.gmra.mrb[0].mxu0 %v57
    %v343 = vpop.f32.mrb[0].mxu0
    %v344 = vadd.f32 0.0, %v343
    %v345 = vpop.f32.mrb[0].mxu0
    %v346 = vadd.f32 0.0, %v345
    %347 = vdwg.mxu0
    %348 = vst [vmem:[#allocation5] sm:$0xff] %v158
    %349 = vst [vmem:[#allocation5 + $0x8] sm:$0xff] %v160
    %350 = vst [vmem:[#allocation5 + $0x10] sm:$0xff] %v164
    %351 = vst [vmem:[#allocation5 + $0x18] sm:$0xff] %v166
    %352 = vst [vmem:[#allocation5 + $0x20] sm:$0xff] %v170
    %353 = vst [vmem:[#allocation5 + $0x28] sm:$0xff] %v172
    %354 = vst [vmem:[#allocation5 + $0x30] sm:$0xff] %v176
    %355 = vst [vmem:[#allocation5 + $0x38] sm:$0xff] %v178
    %356 = vst [vmem:[#allocation5 + $0x40] sm:$0xff] %v182
    %357 = vst [vmem:[#allocation5 + $0x48] sm:$0xff] %v184
    %358 = vst [vmem:[#allocation5 + $0x50] sm:$0xff] %v188
    %359 = vst [vmem:[#allocation5 + $0x58] sm:$0xff] %v190
    %360 = vst [vmem:[#allocation5 + $0x60] sm:$0xff] %v194
    %361 = vst [vmem:[#allocation5 + $0x68] sm:$0xff] %v196
    %362 = vst [vmem:[#allocation5 + $0x70] sm:$0xff] %v200
    %363 = vst [vmem:[#allocation5 + $0x78] sm:$0xff] %v202
    %364 = vst [vmem:[#allocation5 + $0x80] sm:$0xff] %v206
    %365 = vst [vmem:[#allocation5 + $0x88] sm:$0xff] %v208
    %366 = vst [vmem:[#allocation5 + $0x90] sm:$0xff] %v212
    %367 = vst [vmem:[#allocation5 + $0x98] sm:$0xff] %v214
    %368 = vst [vmem:[#allocation5 + $0xa0] sm:$0xff] %v218
    %369 = vst [vmem:[#allocation5 + $0xa8] sm:$0xff] %v220
    %370 = vst [vmem:[#allocation5 + $0xb0] sm:$0xff] %v224
    %371 = vst [vmem:[#allocation5 + $0xb8] sm:$0xff] %v226
    %372 = vst [vmem:[#allocation5 + $0xc0] sm:$0xff] %v230
    %373 = vst [vmem:[#allocation5 + $0xc8] sm:$0xff] %v232
    %374 = vst [vmem:[#allocation5 + $0xd0] sm:$0xff] %v236
    %375 = vst [vmem:[#allocation5 + $0xd8] sm:$0xff] %v238
    %376 = vst [vmem:[#allocation5 + $0xe0] sm:$0xff] %v242
    %377 = vst [vmem:[#allocation5 + $0xe8] sm:$0xff] %v244
    %378 = vst [vmem:[#allocation5 + $0xf0] sm:$0xff] %v248
    %379 = vst [vmem:[#allocation5 + $0xf8] sm:$0xff] %v250
    %380 = vst [vmem:[#allocation5 + $0x100] sm:$0xff] %v254
    %381 = vst [vmem:[#allocation5 + $0x108] sm:$0xff] %v256
    %382 = vst [vmem:[#allocation5 + $0x110] sm:$0xff] %v260
    %383 = vst [vmem:[#allocation5 + $0x118] sm:$0xff] %v262
    %384 = vst [vmem:[#allocation5 + $0x120] sm:$0xff] %v266
    %385 = vst [vmem:[#allocation5 + $0x128] sm:$0xff] %v268
    %386 = vst [vmem:[#allocation5 + $0x130] sm:$0xff] %v272
    %387 = vst [vmem:[#allocation5 + $0x138] sm:$0xff] %v274
    %388 = vst [vmem:[#allocation5 + $0x140] sm:$0xff] %v278
    %389 = vst [vmem:[#allocation5 + $0x148] sm:$0xff] %v280
    %390 = vst [vmem:[#allocation5 + $0x150] sm:$0xff] %v284
    %391 = vst [vmem:[#allocation5 + $0x158] sm:$0xff] %v286
    %392 = vst [vmem:[#allocation5 + $0x160] sm:$0xff] %v290
    %393 = vst [vmem:[#allocation5 + $0x168] sm:$0xff] %v292
    %394 = vst [vmem:[#allocation5 + $0x170] sm:$0xff] %v296
    %395 = vst [vmem:[#allocation5 + $0x178] sm:$0xff] %v298
    %396 = vst [vmem:[#allocation5 + $0x180] sm:$0xff] %v302
    %397 = vst [vmem:[#allocation5 + $0x188] sm:$0xff] %v304
    %398 = vst [vmem:[#allocation5 + $0x190] sm:$0xff] %v308
    %399 = vst [vmem:[#allocation5 + $0x198] sm:$0xff] %v310
    %400 = vst [vmem:[#allocation5 + $0x1a0] sm:$0xff] %v314
    %401 = vst [vmem:[#allocation5 + $0x1a8] sm:$0xff] %v316
    %402 = vst [vmem:[#allocation5 + $0x1b0] sm:$0xff] %v320
    %403 = vst [vmem:[#allocation5 + $0x1b8] sm:$0xff] %v322
    %404 = vst [vmem:[#allocation5 + $0x1c0] sm:$0xff] %v326
    %405 = vst [vmem:[#allocation5 + $0x1c8] sm:$0xff] %v328
    %406 = vst [vmem:[#allocation5 + $0x1d0] sm:$0xff] %v332
    %407 = vst [vmem:[#allocation5 + $0x1d8] sm:$0xff] %v334
    %408 = vst [vmem:[#allocation5 + $0x1e0] sm:$0xff] %v338
    %409 = vst [vmem:[#allocation5 + $0x1e8] sm:$0xff] %v340
    %410 = vst [vmem:[#allocation5 + $0x1f0] sm:$0xff] %v344
    %411 = vst [vmem:[#allocation5 + $0x1f8] sm:$0xff] %v346
    // Predicated region
    $region10: #{tpu_custom_call.1} parent=1 // pred_check
      _
    $region11: #{tpu_custom_call.1} parent=1 // pred_check_branch
      %413 = sbr.rel (0) target = $region13
    $region12: #{tpu_custom_call.1} parent=1 // pred_region
      %s415 = ssub.s32 8192, 8192
      %416 = vsyncadd [#allocation4], %s415
      %s417 = sshll.u32 [#allocation5], 4
      %s418 = int_to_ptr.vmem [resolvable:$true] %s417
      %423 = dma.vmem_to_hbm [thread:$0]  %s418, 8192, %s1, [#allocation4], 256, 256, 16
    $region13: #{tpu_custom_call.1} parent=1 // pred_fallthru
      _
    // Predicated region
    $region14: #{tpu_custom_call.1} parent=1 // pred_check
      _
    $region15: #{tpu_custom_call.1} parent=1 // pred_check_branch
      %425 = sbr.rel (0) target = $region17
    $region16: #{tpu_custom_call.1} parent=1 // pred_region
      %426 = dma.done [#allocation4], 8192
    $region17: #{tpu_custom_call.1} parent=1 // pred_fallthru
      _
    %427 = vsyncpa [#allocation3], 1
    %428 = vsyncpa [#allocation4], 1

// kernel: tpu_custom_call.1
$region0: #{tpu_custom_call.1}
  #allocation0 [shape = 'u32[]', space=smem, size = 0x4, offset = 0x4, fixed_abs, tag = 'smem constant byte address 0x4 - core index']
  #allocation1 [shape = 'u32[144,128]{1,0:T(1,128)}', space=vmem, size = 0x12000, scoped, tag = 'internal scratch']
  %s0 = inlined_call_operand.hbm [shape: f32[256,128], index: 0, kind: input, shape index: {}]
  %s1 = inlined_call_operand.hbm [shape: f32[256,256], index: 1, kind: output, shape index: {}]
  %s2 = sld [smem:[#allocation0]]
  $region18: #{tpu_custom_call.1} parent=0
    _
  %s4 = ssub.s32 1, %s2
  %s5 = scalar_select 0, %s4, %s2
  $region1: #{tpu_custom_call.1} parent=0
    #allocation2 [shape = 'u8[131072]{0}', space=vmem, size = 0x20000, scoped, tag = 'input window, operand 0, single buffered']
    #allocation3 [shape = 's32[1]{0}', space=sflag, size = 0x4, scoped, tag = 'scoped memory for tpu_custom_call.1']
    #allocation4 [shape = 's32[1]{0}', space=sflag, size = 0x4, scoped, tag = 'scoped memory for tpu_custom_call.1']
    #allocation5 [shape = 'u8[262144]{0}', space=vmem, size = 0x40000, scoped, tag = 'output window, operand 0, single buffered']
    %6 = vsyncpa [#allocation3], 0
    %7 = vsyncpa [#allocation4], 0
    // Predicated region
    $region2: #{tpu_custom_call.1} parent=1 // pred_check
      _
    $region3: #{tpu_custom_call.1} parent=1 // pred_check_branch
      %9 = sbr.rel (0) target = $region5
    $region4: #{tpu_custom_call.1} parent=1 // pred_region
      %s11 = ssub.s32 4096, 4096
      %12 = vsyncadd [#allocation3], %s11
      %s13 = sshll.u32 [#allocation2], 4
      %s14 = int_to_ptr.vmem [resolvable:$true] %s13
      %19 = dma.hbm_to_vmem [thread:$0]  %s0, 4096, %s14, [#allocation3], 128, 128, 8
    $region5: #{tpu_custom_call.1} parent=1 // pred_fallthru
      _
    // Predicated region
    $region6: #{tpu_custom_call.1} parent=1 // pred_check
      _
    $region7: #{tpu_custom_call.1} parent=1 // pred_check_branch
      %21 = sbr.rel (0) target = $region9
    $region8: #{tpu_custom_call.1} parent=1 // pred_region
      %22 = dma.done [#allocation3], 4096
    $region9: #{tpu_custom_call.1} parent=1 // pred_fallthru
      _
    %s23 = smul.u32 0, 256
    %s24 = smul.u32 0, 256
    %s25 = scalar_lea.vmem [#allocation2], %s23
    %v26 = vld [vmem:[%s25] sm:$0xff]
    %v27 = vld [vmem:[%s25 + $0x8] sm:$0xff]
    %v28 = vld [vmem:[%s25 + $0x10] sm:$0xff]
    %v29 = vld [vmem:[%s25 + $0x18] sm:$0xff]
    %v30 = vld [vmem:[%s25 + $0x20] sm:$0xff]
    %v31 = vld [vmem:[%s25 + $0x28] sm:$0xff]
    %v32 = vld [vmem:[%s25 + $0x30] sm:$0xff]
    %v33 = vld [vmem:[%s25 + $0x38] sm:$0xff]
    %v34 = vld [vmem:[%s25 + $0x40] sm:$0xff]
    %v35 = vld [vmem:[%s25 + $0x48] sm:$0xff]
    %v36 = vld [vmem:[%s25 + $0x50] sm:$0xff]
    %v37 = vld [vmem:[%s25 + $0x58] sm:$0xff]
    %v38 = vld [vmem:[%s25 + $0x60] sm:$0xff]
    %v39 = vld [vmem:[%s25 + $0x68] sm:$0xff]
    %v40 = vld [vmem:[%s25 + $0x70] sm:$0xff]
    %v41 = vld [vmem:[%s25 + $0x78] sm:$0xff]
    %v42 = vld [vmem:[%s25 + $0x80] sm:$0xff]
    %v43 = vld [vmem:[%s25 + $0x88] sm:$0xff]
    %v44 = vld [vmem:[%s25 + $0x90] sm:$0xff]
    %v45 = vld [vmem:[%s25 + $0x98] sm:$0xff]
    %v46 = vld [vmem:[%s25 + $0xa0] sm:$0xff]
    %v47 = vld [vmem:[%s25 + $0xa8] sm:$0xff]
    %v48 = vld [vmem:[%s25 + $0xb0] sm:$0xff]
    %v49 = vld [vmem:[%s25 + $0xb8] sm:$0xff]
    %v50 = vld [vmem:[%s25 + $0xc0] sm:$0xff]
    %v51 = vld [vmem:[%s25 + $0xc8] sm:$0xff]
    %v52 = vld [vmem:[%s25 + $0xd0] sm:$0xff]
    %v53 = vld [vmem:[%s25 + $0xd8] sm:$0xff]
    %v54 = vld [vmem:[%s25 + $0xe0] sm:$0xff]
    %v55 = vld [vmem:[%s25 + $0xe8] sm:$0xff]
    %v56 = vld [vmem:[%s25 + $0xf0] sm:$0xff]
    %v57 = vld [vmem:[%s25 + $0xf8] sm:$0xff]
    %s58 = scalar_lea.vmem [#allocation2], %s24
    %v59 = vld [vmem:[%s58] sm:$0xff]
    %v60 = vld [vmem:[%s58 + $0x8] sm:$0xff]
    %v61 = vld [vmem:[%s58 + $0x10] sm:$0xff]
    %v62 = vld [vmem:[%s58 + $0x18] sm:$0xff]
    %v63 = vld [vmem:[%s58 + $0x20] sm:$0xff]
    %v64 = vld [vmem:[%s58 + $0x28] sm:$0xff]
    %v65 = vld [vmem:[%s58 + $0x30] sm:$0xff]
    %v66 = vld [vmem:[%s58 + $0x38] sm:$0xff]
    %v67 = vld [vmem:[%s58 + $0x40] sm:$0xff]
    %v68 = vld [vmem:[%s58 + $0x48] sm:$0xff]
    %v69 = vld [vmem:[%s58 + $0x50] sm:$0xff]
    %v70 = vld [vmem:[%s58 + $0x58] sm:$0xff]
    %v71 = vld [vmem:[%s58 + $0x60] sm:$0xff]
    %v72 = vld [vmem:[%s58 + $0x68] sm:$0xff]
    %v73 = vld [vmem:[%s58 + $0x70] sm:$0xff]
    %v74 = vld [vmem:[%s58 + $0x78] sm:$0xff]
    %v75 = vld [vmem:[%s58 + $0x80] sm:$0xff]
    %v76 = vld [vmem:[%s58 + $0x88] sm:$0xff]
    %v77 = vld [vmem:[%s58 + $0x90] sm:$0xff]
    %v78 = vld [vmem:[%s58 + $0x98] sm:$0xff]
    %v79 = vld [vmem:[%s58 + $0xa0] sm:$0xff]
    %v80 = vld [vmem:[%s58 + $0xa8] sm:$0xff]
    %v81 = vld [vmem:[%s58 + $0xb0] sm:$0xff]
    %v82 = vld [vmem:[%s58 + $0xb8] sm:$0xff]
    %v83 = vld [vmem:[%s58 + $0xc0] sm:$0xff]
    %v84 = vld [vmem:[%s58 + $0xc8] sm:$0xff]
    %v85 = vld [vmem:[%s58 + $0xd0] sm:$0xff]
    %v86 = vld [vmem:[%s58 + $0xd8] sm:$0xff]
    %v87 = vld [vmem:[%s58 + $0xe0] sm:$0xff]
    %v88 = vld [vmem:[%s58 + $0xe8] sm:$0xff]
    %v89 = vld [vmem:[%s58 + $0xf0] sm:$0xff]
    %v90 = vld [vmem:[%s58 + $0xf8] sm:$0xff]
    %91 = vmatprep.subr.mxu0 0.0
    %92 = vmatpush1.xpose.msra.mxu0 %v59
    %93 = vmatprep.subr.mxu0 0.0
    %94 = vmatpush1.xpose.msra.mxu0 %v60
    %95 = vmatprep.subr.mxu0 0.0
    %96 = vmatpush1.xpose.msra.mxu0 %v61
    %97 = vmatprep.subr.mxu0 0.0
    %98 = vmatpush1.xpose.msra.mxu0 %v62
    %99 = vmatprep.subr.mxu0 0.0
    %100 = vmatpush1.xpose.msra.mxu0 %v63
    %101 = vmatprep.subr.mxu0 0.0
    %102 = vmatpush1.xpose.msra.mxu0 %v64
    %103 = vmatprep.subr.mxu0 0.0
    %104 = vmatpush1.xpose.msra.mxu0 %v65
    %105 = vmatprep.subr.mxu0 0.0
    %106 = vmatpush1.xpose.msra.mxu0 %v66
    %107 = vmatprep.subr.mxu0 0.0
    %108 = vmatpush1.xpose.msra.mxu0 %v67
    %109 = vmatprep.subr.mxu0 0.0
    %110 = vmatpush1.xpose.msra.mxu0 %v68
    %111 = vmatprep.subr.mxu0 0.0
    %112 = vmatpush1.xpose.msra.mxu0 %v69
    %113 = vmatprep.subr.mxu0 0.0
    %114 = vmatpush1.xpose.msra.mxu0 %v70
    %115 = vmatprep.subr.mxu0 0.0
    %116 = vmatpush1.xpose.msra.mxu0 %v71
    %117 = vmatprep.subr.mxu0 0.0
    %118 = vmatpush1.xpose.msra.mxu0 %v72
    %119 = vmatprep.subr.mxu0 0.0
    %120 = vmatpush1.xpose.msra.mxu0 %v73
    %121 = vmatprep.subr.mxu0 0.0
    %122 = vmatpush1.xpose.msra.mxu0 %v74
    %123 = vmatprep.subr.mxu0 0.0
    %124 = vmatpush1.xpose.msra.mxu0 %v75
    %125 = vmatprep.subr.mxu0 0.0
    %126 = vmatpush1.xpose.msra.mxu0 %v76
    %127 = vmatprep.subr.mxu0 0.0
    %128 = vmatpush1.xpose.msra.mxu0 %v77
    %129 = vmatprep.subr.mxu0 0.0
    %130 = vmatpush1.xpose.msra.mxu0 %v78
    %131 = vmatprep.subr.mxu0 0.0
    %132 = vmatpush1.xpose.msra.mxu0 %v79
    %133 = vmatprep.subr.mxu0 0.0
    %134 = vmatpush1.xpose.msra.mxu0 %v80
    %135 = vmatprep.subr.mxu0 0.0
    %136 = vmatpush1.xpose.msra.mxu0 %v81
    %137 = vmatprep.subr.mxu0 0.0
    %138 = vmatpush1.xpose.msra.mxu0 %v82
    %139 = vmatprep.subr.mxu0 0.0
    %140 = vmatpush1.xpose.msra.mxu0 %v83
    %141 = vmatprep.subr.mxu0 0.0
    %142 = vmatpush1.xpose.msra.mxu0 %v84
    %143 = vmatprep.subr.mxu0 0.0
    %144 = vmatpush1.xpose.msra.mxu0 %v85
    %145 = vmatprep.subr.mxu0 0.0
    %146 = vmatpush1.xpose.msra.mxu0 %v86
    %147 = vmatprep.subr.mxu0 0.0
    %148 = vmatpush1.xpose.msra.mxu0 %v87
    %149 = vmatprep.subr.mxu0 0.0
    %150 = vmatpush1.xpose.msra.mxu0 %v88
    %151 = vmatprep.subr.mxu0 0.0
    %152 = vmatpush1.xpose.msra.mxu0 %v89
    %153 = vmatprep.subr.mxu0 0.0
    %154 = vmatpush1.xpose.msra.mxu0 %v90
    %155 = vmatprep.mubr.f32.mxu0 0.0
    %156 = vmatmul.mubr.f32.gmra.mrb[0].mxu0 %v26
    %v157 = vpop.f32.mrb[0].mxu0
    %v158 = vadd.f32 0.0, %v157
    %v159 = vpop.f32.mrb[0].mxu0
    %v160 = vadd.f32 0.0, %v159
    %161 = vmatprep.mubr.f32.mxu0 0.0
    %162 = vmatmul.mubr.f32.gmra.mrb[0].mxu0 %v27
    %v163 = vpop.f32.mrb[0].mxu0
    %v164 = vadd.f32 0.0, %v163
    %v165 = vpop.f32.mrb[0].mxu0
    %v166 = vadd.f32 0.0, %v165
    %167 = vmatprep.mubr.f32.mxu0 0.0
    %168 = vmatmul.mubr.f32.gmra.mrb[0].mxu0 %v28
    %v169 = vpop.f32.mrb[0].mxu0
    %v170 = vadd.f32 0.0, %v169
    %v171 = vpop.f32.mrb[0].mxu0
    %v172 = vadd.f32 0.0, %v171
    %173 = vmatprep.mubr.f32.mxu0 0.0
    %174 = vmatmul.mubr.f32.gmra.mrb[0].mxu0 %v29
    %v175 = vpop.f32.mrb[0].mxu0
    %v176 = vadd.f32 0.0, %v175
    %v177 = vpop.f32.mrb[0].mxu0
    %v178 = vadd.f32 0.0, %v177
    %179 = vmatprep.mubr.f32.mxu0 0.0
    %180 = vmatmul.mubr.f32.gmra.mrb[0].mxu0 %v30
    %v181 = vpop.f32.mrb[0].mxu0
    %v182 = vadd.f32 0.0, %v181
    %v183 = vpop.f32.mrb[0].mxu0
    %v184 = vadd.f32 0.0, %v183
    %185 = vmatprep.mubr.f32.mxu0 0.0
    %186 = vmatmul.mubr.f32.gmra.mrb[0].mxu0 %v31
    %v187 = vpop.f32.mrb[0].mxu0
    %v188 = vadd.f32 0.0, %v187
    %v189 = vpop.f32.mrb[0].mxu0
    %v190 = vadd.f32 0.0, %v189
    %191 = vmatprep.mubr.f32.mxu0 0.0
    %192 = vmatmul.mubr.f32.gmra.mrb[0].mxu0 %v32
    %v193 = vpop.f32.mrb[0].mxu0
    %v194 = vadd.f32 0.0, %v193
    %v195 = vpop.f32.mrb[0].mxu0
    %v196 = vadd.f32 0.0, %v195
    %197 = vmatprep.mubr.f32.mxu0 0.0
    %198 = vmatmul.mubr.f32.gmra.mrb[0].mxu0 %v33
    %v199 = vpop.f32.mrb[0].mxu0
    %v200 = vadd.f32 0.0, %v199
    %v201 = vpop.f32.mrb[0].mxu0
    %v202 = vadd.f32 0.0, %v201
    %203 = vmatprep.mubr.f32.mxu0 0.0
    %204 = vmatmul.mubr.f32.gmra.mrb[0].mxu0 %v34
    %v205 = vpop.f32.mrb[0].mxu0
    %v206 = vadd.f32 0.0, %v205
    %v207 = vpop.f32.mrb[0].mxu0
    %v208 = vadd.f32 0.0, %v207
    %209 = vmatprep.mubr.f32.mxu0 0.0
    %210 = vmatmul.mubr.f32.gmra.mrb[0].mxu0 %v35
    %v211 = vpop.f32.mrb[0].mxu0
    %v212 = vadd.f32 0.0, %v211
    %v213 = vpop.f32.mrb[0].mxu0
    %v214 = vadd.f32 0.0, %v213
    %215 = vmatprep.mubr.f32.mxu0 0.0
    %216 = vmatmul.mubr.f32.gmra.mrb[0].mxu0 %v36
    %v217 = vpop.f32.mrb[0].mxu0
    %v218 = vadd.f32 0.0, %v217
    %v219 = vpop.f32.mrb[0].mxu0
    %v220 = vadd.f32 0.0, %v219
    %221 = vmatprep.mubr.f32.mxu0 0.0
    %222 = vmatmul.mubr.f32.gmra.mrb[0].mxu0 %v37
    %v223 = vpop.f32.mrb[0].mxu0
    %v224 = vadd.f32 0.0, %v223
    %v225 = vpop.f32.mrb[0].mxu0
    %v226 = vadd.f32 0.0, %v225
    %227 = vmatprep.mubr.f32.mxu0 0.0
    %228 = vmatmul.mubr.f32.gmra.mrb[0].mxu0 %v38
    %v229 = vpop.f32.mrb[0].mxu0
    %v230 = vadd.f32 0.0, %v229
    %v231 = vpop.f32.mrb[0].mxu0
    %v232 = vadd.f32 0.0, %v231
    %233 = vmatprep.mubr.f32.mxu0 0.0
    %234 = vmatmul.mubr.f32.gmra.mrb[0].mxu0 %v39
    %v235 = vpop.f32.mrb[0].mxu0
    %v236 = vadd.f32 0.0, %v235
    %v237 = vpop.f32.mrb[0].mxu0
    %v238 = vadd.f32 0.0, %v237
    %239 = vmatprep.mubr.f32.mxu0 0.0
    %240 = vmatmul.mubr.f32.gmra.mrb[0].mxu0 %v40
    %v241 = vpop.f32.mrb[0].mxu0
    %v242 = vadd.f32 0.0, %v241
    %v243 = vpop.f32.mrb[0].mxu0
    %v244 = vadd.f32 0.0, %v243
    %245 = vmatprep.mubr.f32.mxu0 0.0
    %246 = vmatmul.mubr.f32.gmra.mrb[0].mxu0 %v41
    %v247 = vpop.f32.mrb[0].mxu0
    %v248 = vadd.f32 0.0, %v247
    %v249 = vpop.f32.mrb[0].mxu0
    %v250 = vadd.f32 0.0, %v249
    %251 = vmatprep.mubr.f32.mxu0 0.0
    %252 = vmatmul.mubr.f32.gmra.mrb[0].mxu0 %v42
    %v253 = vpop.f32.mrb[0].mxu0
    %v254 = vadd.f32 0.0, %v253
    %v255 = vpop.f32.mrb[0].mxu0
    %v256 = vadd.f32 0.0, %v255
    %257 = vmatprep.mubr.f32.mxu0 0.0
    %258 = vmatmul.mubr.f32.gmra.mrb[0].mxu0 %v43
    %v259 = vpop.f32.mrb[0].mxu0
    %v260 = vadd.f32 0.0, %v259
    %v261 = vpop.f32.mrb[0].mxu0
    %v262 = vadd.f32 0.0, %v261
    %263 = vmatprep.mubr.f32.mxu0 0.0
    %264 = vmatmul.mubr.f32.gmra.mrb[0].mxu0 %v44
    %v265 = vpop.f32.mrb[0].mxu0
    %v266 = vadd.f32 0.0, %v265
    %v267 = vpop.f32.mrb[0].mxu0
    %v268 = vadd.f32 0.0, %v267
    %269 = vmatprep.mubr.f32.mxu0 0.0
    %270 = vmatmul.mubr.f32.gmra.mrb[0].mxu0 %v45
    %v271 = vpop.f32.mrb[0].mxu0
    %v272 = vadd.f32 0.0, %v271
    %v273 = vpop.f32.mrb[0].mxu0
    %v274 = vadd.f32 0.0, %v273
    %275 = vmatprep.mubr.f32.mxu0 0.0
    %276 = vmatmul.mubr.f32.gmra.mrb[0].mxu0 %v46
    %v277 = vpop.f32.mrb[0].mxu0
    %v278 = vadd.f32 0.0, %v277
    %v279 = vpop.f32.mrb[0].mxu0
    %v280 = vadd.f32 0.0, %v279
    %281 = vmatprep.mubr.f32.mxu0 0.0
    %282 = vmatmul.mubr.f32.gmra.mrb[0].mxu0 %v47
    %v283 = vpop.f32.mrb[0].mxu0
    %v284 = vadd.f32 0.0, %v283
    %v285 = vpop.f32.mrb[0].mxu0
    %v286 = vadd.f32 0.0, %v285
    %287 = vmatprep.mubr.f32.mxu0 0.0
    %288 = vmatmul.mubr.f32.gmra.mrb[0].mxu0 %v48
    %v289 = vpop.f32.mrb[0].mxu0
    %v290 = vadd.f32 0.0, %v289
    %v291 = vpop.f32.mrb[0].mxu0
    %v292 = vadd.f32 0.0, %v291
    %293 = vmatprep.mubr.f32.mxu0 0.0
    %294 = vmatmul.mubr.f32.gmra.mrb[0].mxu0 %v49
    %v295 = vpop.f32.mrb[0].mxu0
    %v296 = vadd.f32 0.0, %v295
    %v297 = vpop.f32.mrb[0].mxu0
    %v298 = vadd.f32 0.0, %v297
    %299 = vmatprep.mubr.f32.mxu0 0.0
    %300 = vmatmul.mubr.f32.gmra.mrb[0].mxu0 %v50
    %v301 = vpop.f32.mrb[0].mxu0
    %v302 = vadd.f32 0.0, %v301
    %v303 = vpop.f32.mrb[0].mxu0
    %v304 = vadd.f32 0.0, %v303
    %305 = vmatprep.mubr.f32.mxu0 0.0
    %306 = vmatmul.mubr.f32.gmra.mrb[0].mxu0 %v51
    %v307 = vpop.f32.mrb[0].mxu0
    %v308 = vadd.f32 0.0, %v307
    %v309 = vpop.f32.mrb[0].mxu0
    %v310 = vadd.f32 0.0, %v309
    %311 = vmatprep.mubr.f32.mxu0 0.0
    %312 = vmatmul.mubr.f32.gmra.mrb[0].mxu0 %v52
    %v313 = vpop.f32.mrb[0].mxu0
    %v314 = vadd.f32 0.0, %v313
    %v315 = vpop.f32.mrb[0].mxu0
    %v316 = vadd.f32 0.0, %v315
    %317 = vmatprep.mubr.f32.mxu0 0.0
    %318 = vmatmul.mubr.f32.gmra.mrb[0].mxu0 %v53
    %v319 = vpop.f32.mrb[0].mxu0
    %v320 = vadd.f32 0.0, %v319
    %v321 = vpop.f32.mrb[0].mxu0
    %v322 = vadd.f32 0.0, %v321
    %323 = vmatprep.mubr.f32.mxu0 0.0
    %324 = vmatmul.mubr.f32.gmra.mrb[0].mxu0 %v54
    %v325 = vpop.f32.mrb[0].mxu0
    %v326 = vadd.f32 0.0, %v325
    %v327 = vpop.f32.mrb[0].mxu0
    %v328 = vadd.f32 0.0, %v327
    %329 = vmatprep.mubr.f32.mxu0 0.0
    %330 = vmatmul.mubr.f32.gmra.mrb[0].mxu0 %v55
    %v331 = vpop.f32.mrb[0].mxu0
    %v332 = vadd.f32 0.0, %v331
    %v333 = vpop.f32.mrb[0].mxu0
    %v334 = vadd.f32 0.0, %v333
    %335 = vmatprep.mubr.f32.mxu0 0.0
    %336 = vmatmul.mubr.f32.gmra.mrb[0].mxu0 %v56
    %v337 = vpop.f32.mrb[0].mxu0
    %v338 = vadd.f32 0.0, %v337
    %v339 = vpop.f32.mrb[0].mxu0
    %v340 = vadd.f32 0.0, %v339
    %341 = vmatprep.mubr.f32.mxu0 0.0
    %342 = vmatmul.mubr.f32.gmra.mrb[0].mxu0 %v57
    %v343 = vpop.f32.mrb[0].mxu0
    %v344 = vadd.f32 0.0, %v343
    %v345 = vpop.f32.mrb[0].mxu0
    %v346 = vadd.f32 0.0, %v345
    %347 = vdwg.mxu0
    %348 = vst [vmem:[#allocation5] sm:$0xff] %v158
    %349 = vst [vmem:[#allocation5 + $0x8] sm:$0xff] %v160
    %350 = vst [vmem:[#allocation5 + $0x10] sm:$0xff] %v164
    %351 = vst [vmem:[#allocation5 + $0x18] sm:$0xff] %v166
    %352 = vst [vmem:[#allocation5 + $0x20] sm:$0xff] %v170
    %353 = vst [vmem:[#allocation5 + $0x28] sm:$0xff] %v172
    %354 = vst [vmem:[#allocation5 + $0x30] sm:$0xff] %v176
    %355 = vst [vmem:[#allocation5 + $0x38] sm:$0xff] %v178
    %356 = vst [vmem:[#allocation5 + $0x40] sm:$0xff] %v182
    %357 = vst [vmem:[#allocation5 + $0x48] sm:$0xff] %v184
    %358 = vst [vmem:[#allocation5 + $0x50] sm:$0xff] %v188
    %359 = vst [vmem:[#allocation5 + $0x58] sm:$0xff] %v190
    %360 = vst [vmem:[#allocation5 + $0x60] sm:$0xff] %v194
    %361 = vst [vmem:[#allocation5 + $0x68] sm:$0xff] %v196
    %362 = vst [vmem:[#allocation5 + $0x70] sm:$0xff] %v200
    %363 = vst [vmem:[#allocation5 + $0x78] sm:$0xff] %v202
    %364 = vst [vmem:[#allocation5 + $0x80] sm:$0xff] %v206
    %365 = vst [vmem:[#allocation5 + $0x88] sm:$0xff] %v208
    %366 = vst [vmem:[#allocation5 + $0x90] sm:$0xff] %v212
    %367 = vst [vmem:[#allocation5 + $0x98] sm:$0xff] %v214
    %368 = vst [vmem:[#allocation5 + $0xa0] sm:$0xff] %v218
    %369 = vst [vmem:[#allocation5 + $0xa8] sm:$0xff] %v220
    %370 = vst [vmem:[#allocation5 + $0xb0] sm:$0xff] %v224
    %371 = vst [vmem:[#allocation5 + $0xb8] sm:$0xff] %v226
    %372 = vst [vmem:[#allocation5 + $0xc0] sm:$0xff] %v230
    %373 = vst [vmem:[#allocation5 + $0xc8] sm:$0xff] %v232
    %374 = vst [vmem:[#allocation5 + $0xd0] sm:$0xff] %v236
    %375 = vst [vmem:[#allocation5 + $0xd8] sm:$0xff] %v238
    %376 = vst [vmem:[#allocation5 + $0xe0] sm:$0xff] %v242
    %377 = vst [vmem:[#allocation5 + $0xe8] sm:$0xff] %v244
    %378 = vst [vmem:[#allocation5 + $0xf0] sm:$0xff] %v248
    %379 = vst [vmem:[#allocation5 + $0xf8] sm:$0xff] %v250
    %380 = vst [vmem:[#allocation5 + $0x100] sm:$0xff] %v254
    %381 = vst [vmem:[#allocation5 + $0x108] sm:$0xff] %v256
    %382 = vst [vmem:[#allocation5 + $0x110] sm:$0xff] %v260
    %383 = vst [vmem:[#allocation5 + $0x118] sm:$0xff] %v262
    %384 = vst [vmem:[#allocation5 + $0x120] sm:$0xff] %v266
    %385 = vst [vmem:[#allocation5 + $0x128] sm:$0xff] %v268
    %386 = vst [vmem:[#allocation5 + $0x130] sm:$0xff] %v272
    %387 = vst [vmem:[#allocation5 + $0x138] sm:$0xff] %v274
    %388 = vst [vmem:[#allocation5 + $0x140] sm:$0xff] %v278
    %389 = vst [vmem:[#allocation5 + $0x148] sm:$0xff] %v280
    %390 = vst [vmem:[#allocation5 + $0x150] sm:$0xff] %v284
    %391 = vst [vmem:[#allocation5 + $0x158] sm:$0xff] %v286
    %392 = vst [vmem:[#allocation5 + $0x160] sm:$0xff] %v290
    %393 = vst [vmem:[#allocation5 + $0x168] sm:$0xff] %v292
    %394 = vst [vmem:[#allocation5 + $0x170] sm:$0xff] %v296
    %395 = vst [vmem:[#allocation5 + $0x178] sm:$0xff] %v298
    %396 = vst [vmem:[#allocation5 + $0x180] sm:$0xff] %v302
    %397 = vst [vmem:[#allocation5 + $0x188] sm:$0xff] %v304
    %398 = vst [vmem:[#allocation5 + $0x190] sm:$0xff] %v308
    %399 = vst [vmem:[#allocation5 + $0x198] sm:$0xff] %v310
    %400 = vst [vmem:[#allocation5 + $0x1a0] sm:$0xff] %v314
    %401 = vst [vmem:[#allocation5 + $0x1a8] sm:$0xff] %v316
    %402 = vst [vmem:[#allocation5 + $0x1b0] sm:$0xff] %v320
    %403 = vst [vmem:[#allocation5 + $0x1b8] sm:$0xff] %v322
    %404 = vst [vmem:[#allocation5 + $0x1c0] sm:$0xff] %v326
    %405 = vst [vmem:[#allocation5 + $0x1c8] sm:$0xff] %v328
    %406 = vst [vmem:[#allocation5 + $0x1d0] sm:$0xff] %v332
    %407 = vst [vmem:[#allocation5 + $0x1d8] sm:$0xff] %v334
    %408 = vst [vmem:[#allocation5 + $0x1e0] sm:$0xff] %v338
    %409 = vst [vmem:[#allocation5 + $0x1e8] sm:$0xff] %v340
    %410 = vst [vmem:[#allocation5 + $0x1f0] sm:$0xff] %v344
    %411 = vst [vmem:[#allocation5 + $0x1f8] sm:$0xff] %v346
    // Predicated region
    $region10: #{tpu_custom_call.1} parent=1 // pred_check
      _
    $region11: #{tpu_custom_call.1} parent=1 // pred_check_branch
      %413 = sbr.rel (0) target = $region13
    $region12: #{tpu_custom_call.1} parent=1 // pred_region
      %s415 = ssub.s32 8192, 8192
      %416 = vsyncadd [#allocation4], %s415
      %s417 = sshll.u32 [#allocation5], 4
      %s418 = int_to_ptr.vmem [resolvable:$true] %s417
      %423 = dma.vmem_to_hbm [thread:$0]  %s418, 8192, %s1, [#allocation4], 256, 256, 16
    $region13: #{tpu_custom_call.1} parent=1 // pred_fallthru
      _
    // Predicated region
    $region14: #{tpu_custom_call.1} parent=1 // pred_check
      _
    $region15: #{tpu_custom_call.1} parent=1 // pred_check_branch
      %425 = sbr.rel (0) target = $region17
    $region16: #{tpu_custom_call.1} parent=1 // pred_region
      %426 = dma.done [#allocation4], 8192
    $region17: #{tpu_custom_call.1} parent=1 // pred_fallthru
      _
    %427 = vsyncpa [#allocation3], 1
    %428 = vsyncpa [#allocation4], 1

</llo_original>
